<compile_context>
chip_gen: v6e
topology: v6e:2x2x1
jax: 0.10.0
libtpu: 0.0.40
codegen_flags: <defaults>
</compile_context>

<pallas_src>
import functools

import jax
import jax.numpy as jnp
from jax.experimental import pallas as pl
from jax.experimental.pallas import tpu as pltpu


def _round_up(x, m):
    return ((x + m - 1) // m) * m


def _tsa_ce_kernel(nlt_ref, x_ref, tgt_ref, loss_ref, mask_ref, *,
                   n_valid, steps, tm):
    """Per-row-tile TSA cross-entropy, accumulated per row chunk.

    nlt_ref  : SMEM (1,)   f32   -log(TSA threshold)  (-1e30 => no masking)
    x_ref    : VMEM (TM,C)       logits tile, native dtype (cast in-kernel)
    tgt_ref  : VMEM (TM,1) i32   target class indices
    loss_ref, mask_ref : VMEM (1,1,1) f32 per-chunk partial sums, resident
                         across the inner "arbitrary" reduction axis.
    """
    ci = pl.program_id(0)          # row chunk  ("parallel": megacore on v7x)
    si = pl.program_id(1)          # step within chunk (reduction axis)

    @pl.when(si == 0)
    def _():
        loss_ref[...] = jnp.zeros_like(loss_ref)
        mask_ref[...] = jnp.zeros_like(mask_ref)

    x = x_ref[...].astype(jnp.float32)          # (TM, C); no-op for f32 input
    tgt = tgt_ref[...]                          # (TM, 1) int32
    rows_tm, c = x.shape

    # Numerically stable log-softmax pieces (all reductions are per-row).
    row_max = jnp.max(x, axis=-1, keepdims=True)                     # (TM, 1)
    shifted = x - row_max                                            # (TM, C)
    logsumexp = jnp.log(jnp.sum(jnp.exp(shifted), axis=-1, keepdims=True))

    # Target-class logit via one-hot compare (no dynamic gather on TPU).
    cls_ids = jax.lax.broadcasted_iota(jnp.int32, (rows_tm, c), 1)   # (TM, C)
    tgt_shifted = jnp.sum(jnp.where(cls_ids == tgt, shifted, 0.0),
                          axis=-1, keepdims=True)                    # (TM, 1)

    # Per-sample cross entropy: logsumexp - logit[target]  (= -log p_target).
    ce = logsumexp - tgt_shifted                                     # (TM, 1)

    # Row validity: handles the (unpadded) partial tail block and any surplus
    # grid steps whose block index was clamped to the last block.
    row0 = (ci * steps + si) * tm
    rows = row0 + jax.lax.broadcasted_iota(jnp.int32, (rows_tm, 1), 0)
    valid = rows < n_valid

    # TSA mask without a second exp:  keep  <=>  ce >= -log(threshold).
    keep = jnp.logical_and(valid, ce >= nlt_ref[0])

    # jnp.where (select), NOT multiply: garbage/Inf/NaN in out-of-range rows
    # must not leak into the sums (no jnp.pad of logits anymore).
    loss_ref[...] += jnp.sum(jnp.where(keep, ce, 0.0))
    mask_ref[...] += jnp.sum(jnp.where(keep, 1.0, 0.0))


def tsa_threshold(schedule, step, step_max, num_classes):
    """TSA threshold schedule (scalar, plain JAX). schedule != ''."""
    scale = 5.0
    thresh_start = 1.0 / num_classes
    step_ratio = jnp.asarray(step, jnp.float32) / jnp.asarray(step_max, jnp.float32)
    if schedule == "linear":
        alpha = step_ratio
    elif schedule == "exp":
        alpha = jnp.exp((step_ratio - 1.0) * scale)
    elif schedule == "log":
        alpha = 1.0 - jnp.exp(-step_ratio * scale)
    else:
        raise ValueError(f"unknown schedule {schedule!r}")
    return alpha * (1.0 - thresh_start) + thresh_start


def _vmem_plan():
    """(tile VMEM budget, Mosaic vmem limit) sized to the chip generation."""
    try:
        kind = jax.devices()[0].device_kind.lower()
    except Exception:  # pragma: no cover - best-effort sniff
        kind = ""
    if "v2" in kind or "v3" in kind:
        return 6 * 1024 * 1024, 12 * 1024 * 1024          # 16 MiB physical VMEM
    if "v5" in kind or "v6" in kind:
        return 32 * 1024 * 1024, 64 * 1024 * 1024         # 128 MiB physical VMEM
    return 20 * 1024 * 1024, 40 * 1024 * 1024             # v7x / unknown: 64 MiB


@functools.partial(
    jax.jit, static_argnames=("schedule", "step_max", "max_rows_per_tile"))
def tsa_ce_loss(logits, target, step, *, schedule, step_max,
                max_rows_per_tile=None):
    """Forward pass of TrainingSignalAnnealingCELoss."""
    assert schedule in ("", "linear", "log", "exp")
    n, c = logits.shape
    itemsize = jnp.dtype(logits.dtype).itemsize
    # Sublane packing: 8 rows for 32-bit, 16 for bf16/f16, 32 for 8-bit dtypes.
    sub = {4: 8, 2: 16, 1: 32}.get(itemsize, 8)

    vmem_budget, vmem_limit = _vmem_plan()

    # ---- Row-tile auto-sizer: byte-driven, no artificial row cap. ----------
    # Count what actually lands in VMEM per row:
    #   * logits tile (native dtype, lane-padded to 128), double-buffered
    #   * (tm,1) int32 target tile, lane-padded to 128 lanes, double-buffered
    #   * ~4 tile-sized f32 working arrays (f32 copy / shifted / exp / one-hot)
    c_lanes = _round_up(c, 128)
    per_row = 2 * c_lanes * itemsize + 2 * 128 * 4 + 4 * c_lanes * 4
    tm = max(sub, (vmem_budget // per_row) // sub * sub)
    if max_rows_per_tile is not None:
        tm = max(sub, min(tm, _round_up(max_rows_per_tile, sub)))
    tm = min(tm, _round_up(n, sub))            # never bigger than the data
    if n >= 4 * sub:
        # Prefer >= 4 row blocks so double-buffering has work to overlap and
        # both v7x TensorCores get >= 2 steps each.
        tm = min(tm, max(sub, _round_up(pl.cdiv(n, 4), sub)))

    n_blocks = pl.cdiv(n, tm)
    num_chunks = 2 if n_blocks >= 4 else 1
    steps = pl.cdiv(n_blocks, num_chunks)
    last_block = n_blocks - 1

    # No jnp.pad of logits: the partial tail block and any surplus grid steps
    # (block index clamped to last_block below) are masked in-kernel.
    tgt2d = target.astype(jnp.int32).reshape(n, 1)

    if schedule == "":
        neg_log_thr = jnp.full((1,), -1e30, jnp.float32)   # keep everything
    else:
        thr = tsa_threshold(schedule, step, step_max, c)
        neg_log_thr = (-jnp.log(thr)).astype(jnp.float32).reshape(1)

    def row_block(ci, si):
        # Clamp: the grid may have num_chunks*steps > n_blocks; surplus steps
        # re-read the last block and are fully masked out in the kernel.
        return (jnp.minimum(ci * steps + si, last_block), 0)

    kernel = functools.partial(_tsa_ce_kernel, n_valid=n, steps=steps, tm=tm)

    cost = pl.CostEstimate(
        flops=8 * n * c,
        transcendentals=n * c + 2 * n,
        bytes_accessed=n * c * itemsize + n * 4 + 8 * num_chunks + 4)

    loss_parts, mask_parts = pl.pallas_call(
        kernel,
        out_shape=(
            jax.ShapeDtypeStruct((num_chunks, 1, 1), jnp.float32),
            jax.ShapeDtypeStruct((num_chunks, 1, 1), jnp.float32),
        ),
        grid=(num_chunks, steps),
        in_specs=[
            pl.BlockSpec(memory_space=pltpu.MemorySpace.SMEM),   # -log(thr)
            pl.BlockSpec((tm, c), row_block),                    # logits
            pl.BlockSpec((tm, 1), row_block),                    # targets
        ],
        out_specs=(
            pl.BlockSpec((1, 1, 1), lambda ci, si: (ci, 0, 0)),  # sum(loss*mask)
            pl.BlockSpec((1, 1, 1), lambda ci, si: (ci, 0, 0)),  # sum(mask)
        ),
        compiler_params=pltpu.CompilerParams(
            dimension_semantics=("parallel", "arbitrary"),
            vmem_limit_bytes=vmem_limit),
        cost_estimate=cost,
    )(neg_log_thr, logits, tgt2d)

    sum_loss = jnp.sum(loss_parts)
    sum_mask = jnp.sum(mask_parts)
    # NOTE: matches the PyTorch module exactly (no denominator clamp): if every
    # sample's correct-class prob exceeds the threshold this is 0/0, as upstream.
    return (sum_loss / sum_mask).astype(jnp.float32)


def _reference(logits, target, step, schedule, step_max):
    """Pure-JAX reference matching the PyTorch module."""
    n, c = logits.shape
    x = logits.astype(jnp.float32)
    logp = jax.nn.log_softmax(x, axis=-1)
    ce = -logp[jnp.arange(n), target]
    if schedule == "":
        return ce.mean()
    probs = jax.nn.softmax(x, axis=-1)
    correct = probs[jnp.arange(n), target]
    thr = tsa_threshold(schedule, step, step_max, c)
    mask = (~(correct > thr)).astype(jnp.float32)
    return (ce * mask).sum() / mask.sum()


if __name__ == "__main__":
    key = jax.random.PRNGKey(0)
    k1, k2, k3, k4 = jax.random.split(key, 4)

    N, C = 64, 32              # 64 samples, 32 classes
    STEP, STEP_MAX = 100, 1000

    logits = jax.random.normal(k1, (N, C), dtype=jnp.float32)
    target = jax.random.randint(k2, (N,), 0, C, dtype=jnp.int32)

    ok = True

    def check(name, out, ref, rtol, atol):
        global ok
        out = jax.block_until_ready(out)
        if not jnp.allclose(out, ref, rtol=rtol, atol=atol):
            ok = False
            print(f"MISMATCH {name}: kernel={out} ref={ref}")

    # f32 logits, all schedules.
    for schedule in ("exp", "linear", "log", ""):
        out = tsa_ce_loss(logits, target, STEP,
                          schedule=schedule, step_max=STEP_MAX)
        ref = _reference(logits, target, STEP, schedule, STEP_MAX)
        check(f"f32 schedule={schedule!r}", out, ref, 1e-5, 1e-5)

    # Ragged row count -> partial last block handled in-kernel (no jnp.pad).
    out = tsa_ce_loss(logits[:50], target[:50], STEP,
                      schedule="exp", step_max=STEP_MAX)
    ref = _reference(logits[:50], target[:50], STEP, "exp", STEP_MAX)
    check("ragged n=50", out, ref, 1e-5, 1e-5)

    # bf16 logits stay bf16 in HBM (native-dtype DMA); math is f32 in-kernel.
    logits_bf16 = logits.astype(jnp.bfloat16)
    out = tsa_ce_loss(logits_bf16, target, STEP,
                      schedule="exp", step_max=STEP_MAX)
    ref = _reference(logits_bf16, target, STEP, "exp", STEP_MAX)
    check("bf16", out, ref, 5e-4, 5e-4)

    # Multi-block / 2-chunk grid with a clamped out-of-range trailing block and
    # a partial last tile (forces the small-tile path via max_rows_per_tile).
    N2, C2 = 1000, 128
    logits2 = jax.random.normal(k3, (N2, C2), dtype=jnp.float32)
    target2 = jax.random.randint(k4, (N2,), 0, C2, dtype=jnp.int32)
    out = tsa_ce_loss(logits2, target2, STEP, schedule="log",
                      step_max=STEP_MAX, max_rows_per_tile=96)
    ref = _reference(logits2, target2, STEP, "log", STEP_MAX)
    check("multi-block n=1000", out, ref, 1e-4, 1e-5)

    if ok:
        print("KERNEL_OK")
</pallas_src>

<mosaic_0001>
module attributes {stable_mosaic.version = 11 : i64} {
  func.func @_tsa_ce_kernel(%arg0: i32, %arg1: i32, %arg2: memref<1xf32, #tpu.memory_space<smem>>, %arg3: memref<16x32xf32, #tpu.memory_space<vmem>>, %arg4: memref<16x1xi32, #tpu.memory_space<vmem>>, %arg5: memref<1x1x1xf32, #tpu.memory_space<vmem>>, %arg6: memref<1x1x1xf32, #tpu.memory_space<vmem>>) attributes {dimension_semantics = [#tpu.dimension_semantics<parallel>, #tpu.dimension_semantics<arbitrary>], iteration_bounds = array<i64: 2, 2>, scalar_prefetch = 0 : i64, scratch_operands = 0 : i64, tpu.core_type = #tpu.core_type<tc>, window_params = [{transform_indices = @transform_0, window_bounds = array<i64: 1>}, {transform_indices = @transform_1, window_bounds = array<i64: 16, 32>}, {transform_indices = @transform_2, window_bounds = array<i64: 16, 1>}, {transform_indices = @transform_3, window_bounds = array<i64: 1, 1, 1>}, {transform_indices = @transform_4, window_bounds = array<i64: 1, 1, 1>}]} {
    %c0_i32 = arith.constant 0 : i32
    %0 = arith.cmpi eq, %arg1, %c0_i32 : i32
    %1 = arith.extui %0 : i1 to i32
    %c0_i32_0 = arith.constant 0 : i32
    %2 = arith.cmpi ne, %1, %c0_i32_0 : i32
    scf.if %2 {
      %cst_25 = arith.constant 0.000000e+00 : f32
      %54 = vector.broadcast %cst_25 : f32 to vector<1x1x1xf32>
      %c0_26 = arith.constant 0 : index
      %c0_27 = arith.constant 0 : index
      %c0_28 = arith.constant 0 : index
      %55 = vector.load %arg5[%c0_26, %c0_27, %c0_28] : memref<1x1x1xf32, #tpu.memory_space<vmem>>, vector<1x1x1xf32>
      tpu.vector_store %arg5[%c0_26, %c0_27, %c0_28], %54 {strides = array<i32>} : memref<1x1x1xf32, #tpu.memory_space<vmem>>, vector<1x1x1xf32>,
      %cst_29 = arith.constant 0.000000e+00 : f32
      %56 = vector.broadcast %cst_29 : f32 to vector<1x1x1xf32>
      %c0_30 = arith.constant 0 : index
      %c0_31 = arith.constant 0 : index
      %c0_32 = arith.constant 0 : index
      %57 = vector.load %arg6[%c0_30, %c0_31, %c0_32] : memref<1x1x1xf32, #tpu.memory_space<vmem>>, vector<1x1x1xf32>
      tpu.vector_store %arg6[%c0_30, %c0_31, %c0_32], %56 {strides = array<i32>} : memref<1x1x1xf32, #tpu.memory_space<vmem>>, vector<1x1x1xf32>,
    } else {
    }
    %c0 = arith.constant 0 : index
    %c0_1 = arith.constant 0 : index
    %3 = vector.load %arg3[%c0, %c0_1] : memref<16x32xf32, #tpu.memory_space<vmem>>, vector<16x32xf32>
    %c0_2 = arith.constant 0 : index
    %c0_3 = arith.constant 0 : index
    %4 = vector.load %arg4[%c0_2, %c0_3] : memref<16x1xi32, #tpu.memory_space<vmem>>, vector<16x1xi32>
    %cst = arith.constant dense<0xFF800000> : vector<16xf32>
    %5 = vector.multi_reduction <maximumf>, %3, %cst [1] : vector<16x32xf32> to vector<16xf32>
    %6 = vector.shape_cast %5 : vector<16xf32> to vector<16x1xf32>
    %7 = vector.broadcast %6 : vector<16x1xf32> to vector<16x32xf32>
    %8 = arith.subf %3, %7 : vector<16x32xf32>
    %9 = math.exp %8 : vector<16x32xf32>
    %cst_4 = arith.constant dense<0.000000e+00> : vector<16xf32>
    %10 = vector.multi_reduction <add>, %9, %cst_4 [1] : vector<16x32xf32> to vector<16xf32>
    %11 = vector.shape_cast %10 : vector<16xf32> to vector<16x1xf32>
    %12 = math.log %11 : vector<16x1xf32>
    %13 = tpu.iota {dimensions = array<i32: 1>} : vector<16x32xi32>
    %14 = vector.broadcast %4 : vector<16x1xi32> to vector<16x32xi32>
    %15 = arith.cmpi eq, %13, %14 : vector<16x32xi32>
    %cst_5 = arith.constant 0.000000e+00 : f32
    %16 = vector.broadcast %cst_5 : f32 to vector<16x32xf32>
    %17 = arith.select %15, %8, %16 : vector<16x32xi1>, vector<16x32xf32>
    %cst_6 = arith.constant dense<0.000000e+00> : vector<16xf32>
    %18 = vector.multi_reduction <add>, %17, %cst_6 [1] : vector<16x32xf32> to vector<16xf32>
    %19 = vector.shape_cast %18 : vector<16xf32> to vector<16x1xf32>
    %20 = arith.subf %12, %19 : vector<16x1xf32>
    %c2_i32 = arith.constant 2 : i32
    %21 = arith.muli %arg0, %c2_i32 : i32
    %22 = arith.addi %21, %arg1 : i32
    %c16_i32 = arith.constant 16 : i32
    %23 = arith.muli %22, %c16_i32 : i32
    %24 = tpu.iota {dimensions = array<i32: 0>} : vector<16x1xi32>
    %25 = vector.broadcast %23 : i32 to vector<16x1xi32>
    %26 = arith.addi %25, %24 : vector<16x1xi32>
    %c64_i32 = arith.constant 64 : i32
    %27 = vector.broadcast %c64_i32 : i32 to vector<16x1xi32>
    %28 = arith.cmpi slt, %26, %27 : vector<16x1xi32>
    %c0_7 = arith.constant 0 : index
    %29 = memref.load %arg2[%c0_7] : memref<1xf32, #tpu.memory_space<smem>>
    %30 = vector.broadcast %29 : f32 to vector<16x1xf32>
    %31 = arith.cmpf oge, %20, %30 : vector<16x1xf32>
    %32 = arith.andi %28, %31 : vector<16x1xi1>
    %c0_8 = arith.constant 0 : index
    %c0_9 = arith.constant 0 : index
    %c0_10 = arith.constant 0 : index
    %33 = vector.load %arg5[%c0_8, %c0_9, %c0_10] : memref<1x1x1xf32, #tpu.memory_space<vmem>>, vector<1x1x1xf32>
    %cst_11 = arith.constant 0.000000e+00 : f32
    %34 = vector.broadcast %cst_11 : f32 to vector<16x1xf32>
    %35 = arith.select %32, %20, %34 : vector<16x1xi1>, vector<16x1xf32>
    %36 = vector.shape_cast %35 : vector<16x1xf32> to vector<1x16x1xf32>
    %cst_12 = arith.constant dense<0.000000e+00> : vector<1xf32>
    %37 = vector.multi_reduction <add>, %36, %cst_12 [1, 2] : vector<1x16x1xf32> to vector<1xf32>
    %38 = vector.shape_cast %37 : vector<1xf32> to vector<1x1x1xf32>
    %39 = vector.extract %38[0, 0, 0] : f32 from vector<1x1x1xf32>
    %40 = vector.broadcast %39 : f32 to vector<1x1x1xf32>
    %41 = arith.addf %33, %40 : vector<1x1x1xf32>
    %c0_13 = arith.constant 0 : index
    %c0_14 = arith.constant 0 : index
    %c0_15 = arith.constant 0 : index
    %42 = vector.load %arg5[%c0_13, %c0_14, %c0_15] : memref<1x1x1xf32, #tpu.memory_space<vmem>>, vector<1x1x1xf32>
    tpu.vector_store %arg5[%c0_13, %c0_14, %c0_15], %41 {strides = array<i32>} : memref<1x1x1xf32, #tpu.memory_space<vmem>>, vector<1x1x1xf32>,
    %c0_16 = arith.constant 0 : index
    %c0_17 = arith.constant 0 : index
    %c0_18 = arith.constant 0 : index
    %43 = vector.load %arg6[%c0_16, %c0_17, %c0_18] : memref<1x1x1xf32, #tpu.memory_space<vmem>>, vector<1x1x1xf32>
    %cst_19 = arith.constant 1.000000e+00 : f32
    %cst_20 = arith.constant 0.000000e+00 : f32
    %44 = vector.broadcast %cst_19 : f32 to vector<16x1xf32>
    %45 = vector.broadcast %cst_20 : f32 to vector<16x1xf32>
    %46 = arith.select %32, %44, %45 : vector<16x1xi1>, vector<16x1xf32>
    %47 = vector.shape_cast %46 : vector<16x1xf32> to vector<1x16x1xf32>
    %cst_21 = arith.constant dense<0.000000e+00> : vector<1xf32>
    %48 = vector.multi_reduction <add>, %47, %cst_21 [1, 2] : vector<1x16x1xf32> to vector<1xf32>
    %49 = vector.shape_cast %48 : vector<1xf32> to vector<1x1x1xf32>
    %50 = vector.extract %49[0, 0, 0] : f32 from vector<1x1x1xf32>
    %51 = vector.broadcast %50 : f32 to vector<1x1x1xf32>
    %52 = arith.addf %43, %51 : vector<1x1x1xf32>
    %c0_22 = arith.constant 0 : index
    %c0_23 = arith.constant 0 : index
    %c0_24 = arith.constant 0 : index
    %53 = vector.load %arg6[%c0_22, %c0_23, %c0_24] : memref<1x1x1xf32, #tpu.memory_space<vmem>>, vector<1x1x1xf32>
    tpu.vector_store %arg6[%c0_22, %c0_23, %c0_24], %52 {strides = array<i32>} : memref<1x1x1xf32, #tpu.memory_space<vmem>>, vector<1x1x1xf32>,
    return
  }
  func.func @transform_0(%arg0: i32, %arg1: i32) -> i32 {
    %c0_i32 = arith.constant 0 : i32
    %c0_i32_0 = arith.constant 0 : i32
    return %c0_i32 : i32
  }
  func.func @transform_1(%arg0: i32, %arg1: i32) -> (i32, i32) {
    %c2_i32 = arith.constant 2 : i32
    %0 = arith.muli %arg0, %c2_i32 : i32
    %1 = arith.addi %0, %arg1 : i32
    %c3_i32 = arith.constant 3 : i32
    %2 = arith.minsi %1, %c3_i32 : i32
    %c0_i32 = arith.constant 0 : i32
    %c0_i32_0 = arith.constant 0 : i32
    return %2, %c0_i32 : i32, i32
  }
  func.func @transform_2(%arg0: i32, %arg1: i32) -> (i32, i32) {
    %c2_i32 = arith.constant 2 : i32
    %0 = arith.muli %arg0, %c2_i32 : i32
    %1 = arith.addi %0, %arg1 : i32
    %c3_i32 = arith.constant 3 : i32
    %2 = arith.minsi %1, %c3_i32 : i32
    %c0_i32 = arith.constant 0 : i32
    %c0_i32_0 = arith.constant 0 : i32
    return %2, %c0_i32 : i32, i32
  }
  func.func @transform_3(%arg0: i32, %arg1: i32) -> (i32, i32, i32) {
    %c0_i32 = arith.constant 0 : i32
    %c0_i32_0 = arith.constant 0 : i32
    %c0_i32_1 = arith.constant 0 : i32
    return %arg0, %c0_i32, %c0_i32_0 : i32, i32, i32
  }
  func.func @transform_4(%arg0: i32, %arg1: i32) -> (i32, i32, i32) {
    %c0_i32 = arith.constant 0 : i32
    %c0_i32_0 = arith.constant 0 : i32
    %c0_i32_1 = arith.constant 0 : i32
    return %arg0, %c0_i32, %c0_i32_0 : i32, i32, i32
  }
}

</mosaic_0001>

<llo_original>
// kernel: tsa_ce_loss.1
$region0: #{tsa_ce_loss.1}
  #allocation0 [shape = 'u32[]', space=smem, size = 0x4, offset = 0x4, fixed_abs, tag = 'smem constant byte address 0x4 - core index']
  #allocation1 [shape = 'u32[144,128]{1,0:T(1,128)}', space=vmem, size = 0x12000, scoped, tag = 'internal scratch']
  #allocation2 [shape = 'f32[1]{0:T(128)S(6)}', space=smem, size = 0x200, scoped, tag = 'scoped memory for tsa_ce_loss.1']
  %s0 = inlined_call_operand.<no memory space> [shape: f32[1], index: 0, kind: input, shape index: {}]
  %s1 = inlined_call_operand.vmem [shape: f32[64,32], index: 1, kind: input, shape index: {}]
  %s2 = inlined_call_operand.vmem [shape: s32[64,1], index: 2, kind: input, shape index: {}]
  %s3 = inlined_call_operand.vmem [shape: f32[2,1,1], index: 3, kind: output, shape index: {0}]
  %s4 = inlined_call_operand.vmem [shape: f32[2,1,1], index: 4, kind: output, shape index: {1}]
  %5 = xla_tuple %s3, %s4
  %s6 = sld [smem:[#allocation0]]
  $region57: #{tsa_ce_loss.1} parent=0
    _
  %s8 = ssub.s32 1, %s6
  %s9 = scalar_select 0, %s8, %s6
  %10 = sst [smem:[#allocation2]] %s0
  loop: start=0, step=1, limit=6
  $region2: #{tsa_ce_loss.1} parent=0 // loop_pre_header
    _
  $region3: #{tsa_ce_loss.1} parent=0 // loop_header
    %s12 = sphi 0, %s16
    %p13 = scmp.ge.s32.totalorder %s12, 6
    %s19 = sphi 0, %s31
    %s20 = sphi 0, %s27
    %s21 = sphi 0, %s19
    %s22 = sphi 0, %s20
    %s23 = sphi 0, %s21
    %s24 = sphi 0, %s22
    %s32 = sphi 0, %s32
    %s34 = sphi 0, %s32
    %s35 = sphi 0, %s34
    %s49 = sphi 0, %s35
    %s63 = sphi 0, %s65
    %s66 = sphi 0, %s63
    %s67 = sphi 0, %s66
    %s83 = sphi 0, %s67
    %s97 = sphi 0, %s99
    %s100 = sphi 0, %s97
    %s101 = sphi 0, %s100
    %s117 = sphi 0, %s101
    %s123 = sphi 0, %s125
    %s126 = sphi 0, %s123
    %s127 = sphi 0, %s126
    %s143 = sphi 0, %s127
    %s149 = sphi 0, %s151
    %s152 = sphi 0, %s149
    %s153 = sphi 0, %s152
    %s169 = sphi 0, %s153
  $region4: #{tsa_ce_loss.1} parent=0 // loop_header_branch
    %15 = sbr.rel (%p13) target = $region8
  $region5: #{tsa_ce_loss.1} parent=0 // loop_body
    %s17 = ssub.s32 %s12, 1
    %s18 = ssub.s32 %s12, 2
    %s25 = sadd.s32 1, %s20
    %p26 = scmp.ge.s32.totalorder %s25, 2
    %s27 = scalar_select %p26, 0, %s25
    %s28 = sadd.s32 1, %s19
    %s29 = scalar_select %p26, %s28, %s19
    %p30 = scmp.ge.s32.totalorder %s29, 2
    %s31 = scalar_select %p30, 0, %s29
    %s33 = sadd.s32 %s32, 1
    %p36 = scmp.eq.s32.totalorder %s12, 3
    %p37 = scmp.ne.s32.totalorder %s32, %s34
    %p38 = scmp.eq.s32.totalorder %s12, 0
    %p39 = por %p37, %p38
    %p40 = scmp.ne.s32.totalorder %s32, %s34
    %p41 = scmp.eq.s32.totalorder %s17, 3
    %p42 = por %p40, %p41
    %p43 = scmp.ne.s32.totalorder %s34, %s35
    %p44 = scmp.eq.s32.totalorder %s17, 0
    %p45 = por %p43, %p44
    %p46 = scmp.ne.s32.totalorder %s34, %s35
    %p47 = scmp.eq.s32.totalorder %s18, 3
    %p48 = por %p46, %p47
    %p50 = scmp.ne.s32.totalorder %s35, %s49
    %p51 = scmp.eq.s32.totalorder %s18, 0
    %p52 = por %p50, %p51
    %s53 = smul.u32 %s19, 2
    %s54 = sadd.s32 %s53, %s20
    %p55 = scmp.lt.s32.totalorder %s54, 3
    %s56 = scalar_select %p55, %s54, 3
    %s57 = smul.u32 %s31, 2
    %s58 = sadd.s32 %s57, %s27
    %p59 = scmp.lt.s32.totalorder %s58, 3
    %s60 = scalar_select %p59, %s58, 3
    %s61 = ssub.s32 %s56, %s60
    %p62 = scmp.eq.s32.totalorder %s61, 0
    %s64 = sadd.s32 %s63, 1
    %s65 = scalar_select %p62, %s63, %s64
    %p68 = pneg %p62
    %p69 = scmp.eq.s32.totalorder %s12, 3
    %p70 = por %p68, %p69
    %p71 = scmp.ne.s32.totalorder %s63, %s66
    %p72 = scmp.eq.s32.totalorder %s12, 0
    %p73 = por %p71, %p72
    %p74 = scmp.ne.s32.totalorder %s63, %s66
    %p75 = scmp.eq.s32.totalorder %s17, 3
    %p76 = por %p74, %p75
    %p77 = scmp.ne.s32.totalorder %s66, %s67
    %p78 = scmp.eq.s32.totalorder %s17, 0
    %p79 = por %p77, %p78
    %p80 = scmp.ne.s32.totalorder %s66, %s67
    %p81 = scmp.eq.s32.totalorder %s18, 3
    %p82 = por %p80, %p81
    %p84 = scmp.ne.s32.totalorder %s67, %s83
    %p85 = scmp.eq.s32.totalorder %s18, 0
    %p86 = por %p84, %p85
    %s87 = smul.u32 %s19, 2
    %s88 = sadd.s32 %s87, %s20
    %p89 = scmp.lt.s32.totalorder %s88, 3
    %s90 = scalar_select %p89, %s88, 3
    %s91 = smul.u32 %s31, 2
    %s92 = sadd.s32 %s91, %s27
    %p93 = scmp.lt.s32.totalorder %s92, 3
    %s94 = scalar_select %p93, %s92, 3
    %s95 = ssub.s32 %s90, %s94
    %p96 = scmp.eq.s32.totalorder %s95, 0
    %s98 = sadd.s32 %s97, 1
    %s99 = scalar_select %p96, %s97, %s98
    %p102 = pneg %p96
    %p103 = scmp.eq.s32.totalorder %s12, 3
    %p104 = por %p102, %p103
    %p105 = scmp.ne.s32.totalorder %s97, %s100
    %p106 = scmp.eq.s32.totalorder %s12, 0
    %p107 = por %p105, %p106
    %p108 = scmp.ne.s32.totalorder %s97, %s100
    %p109 = scmp.eq.s32.totalorder %s17, 3
    %p110 = por %p108, %p109
    %p111 = scmp.ne.s32.totalorder %s100, %s101
    %p112 = scmp.eq.s32.totalorder %s17, 0
    %p113 = por %p111, %p112
    %p114 = scmp.ne.s32.totalorder %s100, %s101
    %p115 = scmp.eq.s32.totalorder %s18, 3
    %p116 = por %p114, %p115
    %p118 = scmp.ne.s32.totalorder %s101, %s117
    %p119 = scmp.eq.s32.totalorder %s18, 0
    %p120 = por %p118, %p119
    %s121 = ssub.s32 %s19, %s31
    %p122 = scmp.eq.s32.totalorder %s121, 0
    %s124 = sadd.s32 %s123, 1
    %s125 = scalar_select %p122, %s123, %s124
    %p128 = pneg %p122
    %p129 = scmp.eq.s32.totalorder %s12, 3
    %p130 = por %p128, %p129
    %p131 = scmp.ne.s32.totalorder %s123, %s126
    %p132 = scmp.eq.s32.totalorder %s12, 0
    %p133 = por %p131, %p132
    %p134 = scmp.ne.s32.totalorder %s123, %s126
    %p135 = scmp.eq.s32.totalorder %s17, 3
    %p136 = por %p134, %p135
    %p137 = scmp.ne.s32.totalorder %s126, %s127
    %p138 = scmp.eq.s32.totalorder %s17, 0
    %p139 = por %p137, %p138
    %p140 = scmp.ne.s32.totalorder %s126, %s127
    %p141 = scmp.eq.s32.totalorder %s18, 3
    %p142 = por %p140, %p141
    %p144 = scmp.ne.s32.totalorder %s127, %s143
    %p145 = scmp.eq.s32.totalorder %s18, 0
    %p146 = por %p144, %p145
    %s147 = ssub.s32 %s19, %s31
    %p148 = scmp.eq.s32.totalorder %s147, 0
    %s150 = sadd.s32 %s149, 1
    %s151 = scalar_select %p148, %s149, %s150
    %p154 = pneg %p148
    %p155 = scmp.eq.s32.totalorder %s12, 3
    %p156 = por %p154, %p155
    %p157 = scmp.ne.s32.totalorder %s149, %s152
    %p158 = scmp.eq.s32.totalorder %s12, 0
    %p159 = por %p157, %p158
    %p160 = scmp.ne.s32.totalorder %s149, %s152
    %p161 = scmp.eq.s32.totalorder %s17, 3
    %p162 = por %p160, %p161
    %p163 = scmp.ne.s32.totalorder %s152, %s153
    %p164 = scmp.eq.s32.totalorder %s17, 0
    %p165 = por %p163, %p164
    %p166 = scmp.ne.s32.totalorder %s152, %s153
    %p167 = scmp.eq.s32.totalorder %s18, 3
    %p168 = por %p166, %p167
    %p170 = scmp.ne.s32.totalorder %s153, %s169
    %p171 = scmp.eq.s32.totalorder %s18, 0
    %p172 = por %p170, %p171
    %p173 = scmp.le.s32.totalorder 1, %s12
    %p174 = scmp.lt.s32.totalorder %s12, 5
    %p175 = pnand %p173, %p174
    %p176 = pneg %p175
    // Predicated region
    $region9: #{tsa_ce_loss.1} parent=5 // pred_check
      _
    $region10: #{tsa_ce_loss.1} parent=5 // pred_check_branch
      %178 = sbr.rel (%p175) target = $region12
    $region11: #{tsa_ce_loss.1} parent=5 // pred_region
      %s179 = ssub.s32 %s12, 1
      // Predicated region
      $region13: #{tsa_ce_loss.1} parent=11 // pred_check
        %p180 = pneg %p45
      $region14: #{tsa_ce_loss.1} parent=11 // pred_check_branch
        %182 = sbr.rel (%p180) target = $region16
      $region15: #{tsa_ce_loss.1} parent=11 // pred_region
        _
      $region16: #{tsa_ce_loss.1} parent=11 // pred_fallthru
        _
    $region12: #{tsa_ce_loss.1} parent=5 // pred_fallthru
      _
    %p183 = scmp.lt.s32.totalorder %s12, 4
    // Predicated region
    $region17: #{tsa_ce_loss.1} parent=5 // pred_check
      %p184 = pneg %p183
    $region18: #{tsa_ce_loss.1} parent=5 // pred_check_branch
      %186 = sbr.rel (%p184) target = $region20
    $region19: #{tsa_ce_loss.1} parent=5 // pred_region
      // Predicated region
      $region21: #{tsa_ce_loss.1} parent=19 // pred_check
        %p187 = pneg %p73
      $region22: #{tsa_ce_loss.1} parent=19 // pred_check_branch
        %189 = sbr.rel (%p187) target = $region24
      $region23: #{tsa_ce_loss.1} parent=19 // pred_region
        %s190 = smul.u32 %s19, 2
        %s191 = sadd.s32 %s190, %s20
        %p192 = scmp.lt.s32.totalorder %s191, 3
        %s193 = scalar_select %p192, %s191, 3
        %s194 = smul.u32 2, %s193
        %p195 = scmp.lt.s32.totalorder %s194, 7
        %s196 = scalar_select %p195, %s194, 7
        %s197 = smul.addr %s196, 8
        %s198 = scalar_lea.vmem %s1, %s197
        %s199 = smul.u32 %s19, 2
        %s200 = sadd.s32 %s199, %s20
        %p201 = scmp.lt.s32.totalorder %s200, 3
        %s202 = scalar_select %p201, %s200, 3
        %s203 = smul.u32 2, %s202
      $region24: #{tsa_ce_loss.1} parent=19 // pred_fallthru
        _
      // Predicated region
      $region25: #{tsa_ce_loss.1} parent=19 // pred_check
        %p204 = pneg %p107
      $region26: #{tsa_ce_loss.1} parent=19 // pred_check_branch
        %206 = sbr.rel (%p204) target = $region28
      $region27: #{tsa_ce_loss.1} parent=19 // pred_region
        %s207 = smul.u32 %s19, 2
        %s208 = sadd.s32 %s207, %s20
        %p209 = scmp.lt.s32.totalorder %s208, 3
        %s210 = scalar_select %p209, %s208, 3
        %s211 = smul.u32 2, %s210
        %p212 = scmp.lt.s32.totalorder %s211, 7
        %s213 = scalar_select %p212, %s211, 7
        %s214 = smul.addr %s213, 8
        %s215 = scalar_lea.vmem %s2, %s214
        %s216 = smul.u32 %s19, 2
        %s217 = sadd.s32 %s216, %s20
        %p218 = scmp.lt.s32.totalorder %s217, 3
        %s219 = scalar_select %p218, %s217, 3
        %s220 = smul.u32 2, %s219
      $region28: #{tsa_ce_loss.1} parent=19 // pred_fallthru
        _
    $region20: #{tsa_ce_loss.1} parent=5 // pred_fallthru
      _
    %p221 = scmp.le.s32.totalorder 1, %s12
    %p222 = scmp.lt.s32.totalorder %s12, 5
    %p223 = pnand %p221, %p222
    %p224 = pneg %p223
    // Predicated region
    $region29: #{tsa_ce_loss.1} parent=5 // pred_check
      _
    $region30: #{tsa_ce_loss.1} parent=5 // pred_check_branch
      %226 = sbr.rel (%p223) target = $region32
    $region31: #{tsa_ce_loss.1} parent=5 // pred_region
      %s227 = ssub.s32 %s12, 1
      %p228 = pneg %p45
      %p229 = pneg %p42
      %s230 = smul.u32 %s21, 2
      %s231 = sadd.s32 %s230, %s22
      %p232 = scmp.lt.s32.totalorder %s231, 3
      %s233 = scalar_select %p232, %s231, 3
      %s234 = smul.u32 2, %s233
      %p235 = scmp.lt.s32.totalorder %s234, 7
      %s236 = scalar_select %p235, %s234, 7
      %s237 = smul.addr %s236, 8
      %s238 = scalar_lea.vmem %s1, %s237
      %p239 = pneg %p79
      %p240 = pneg %p76
      %s241 = smul.u32 %s21, 2
      %s242 = sadd.s32 %s241, %s22
      %p243 = scmp.lt.s32.totalorder %s242, 3
      %s244 = scalar_select %p243, %s242, 3
      %s245 = smul.u32 2, %s244
      %p246 = scmp.lt.s32.totalorder %s245, 7
      %s247 = scalar_select %p246, %s245, 7
      %s248 = smul.addr %s247, 8
      %s249 = scalar_lea.vmem %s2, %s248
      %p250 = pneg %p113
      %p251 = pneg %p110
      %p252 = pneg %p139
      %p253 = pneg %p136
      %p254 = scmp.lt.s32.totalorder %s21, 1
      %s255 = scalar_select %p254, %s21, 1
      %s256 = scalar_lea.vmem %s3, %s255
      %p257 = pneg %p165
      %p258 = pneg %p162
      %p259 = scmp.lt.s32.totalorder %s21, 1
      %s260 = scalar_select %p259, %s21, 1
      %s261 = scalar_lea.vmem %s4, %s260
      %s262 = smul.u32 %s21, 2
      %s263 = sadd.s32 %s262, %s22
      %p264 = scmp.lt.s32.totalorder %s263, 3
      %s265 = scalar_select %p264, %s263, 3
      %s266 = smul.u32 2, %s265
      %p267 = scmp.lt.s32.totalorder %s266, 7
      %s268 = scalar_select %p267, %s266, 7
      %s269 = smul.addr %s268, 8
      %s270 = scalar_lea.vmem %s1, %s269
      %s271 = smul.u32 %s21, 2
      %s272 = sadd.s32 %s271, %s22
      %p273 = scmp.lt.s32.totalorder %s272, 3
      %s274 = scalar_select %p273, %s272, 3
      %s275 = smul.u32 2, %s274
      %s276 = smul.u32 %s21, 2
      %s277 = sadd.s32 %s276, %s22
      %p278 = scmp.lt.s32.totalorder %s277, 3
      %s279 = scalar_select %p278, %s277, 3
      %s280 = smul.u32 2, %s279
      %p281 = scmp.lt.s32.totalorder %s280, 7
      %s282 = scalar_select %p281, %s280, 7
      %s283 = smul.addr %s282, 8
      %s284 = scalar_lea.vmem %s2, %s283
      %s285 = smul.u32 %s21, 2
      %s286 = sadd.s32 %s285, %s22
      %p287 = scmp.lt.s32.totalorder %s286, 3
      %s288 = scalar_select %p287, %s286, 3
      %s289 = smul.u32 2, %s288
      %p290 = scmp.lt.s32.totalorder %s21, 1
      %s291 = scalar_select %p290, %s21, 1
      %s292 = scalar_lea.vmem %s3, %s291
      %p293 = scmp.lt.s32.totalorder %s21, 1
      %s294 = scalar_select %p293, %s21, 1
      %s295 = scalar_lea.vmem %s4, %s294
      %p296 = scmp.eq.s32.totalorder %s22, 0
      // Predicated region
      $region33: #{tsa_ce_loss.1} parent=31 // pred_check
        %p297 = pneg %p296
      $region34: #{tsa_ce_loss.1} parent=31 // pred_check_branch
        %299 = sbr.rel (%p297) target = $region36
      $region35: #{tsa_ce_loss.1} parent=31 // pred_region
        %vm300 = vcmask 0
        %301 = vst.msk [vmem:[%s292] sm:$0x1] %vm300, 0.0
        %302 = vst.msk [vmem:[%s295] sm:$0x1] %vm300, 0.0
      $region36: #{tsa_ce_loss.1} parent=31 // pred_fallthru
        _
      %v303 = vld [vmem:[%s270] sm:$0xff]
      %v304 = vld [vmem:[%s270 + $0x8] sm:$0xff]
      %v305 = vld [vmem:[%s284] sm:$0xff]
      %v306 = vld [vmem:[%s284 + $0x8] sm:$0xff]
      %vm307 = vcmask 261120
      %v308 = vsel %vm307, %v303, -inf
      %309 = vmax.xlane.f32.xlu0 %v308
      %v310 = vpop.xlane.xlu0 %309
      %v311 = vsel %vm307, %v304, -inf
      %312 = vmax.xlane.f32.xlu0 %v311
      %v313 = vpop.xlane.xlu0 %312
      %v314 = vsub.f32 %v303, %v310
      %v315 = vsub.f32 %v304, %v313
      %v316 = vmul.f32 %v314, 1.442695
      %v317 = vpow.pop %v316
      %v318 = vmul.f32 %v315, 1.442695
      %v319 = vpow.pop %v318
      %v320 = vsel %vm307, %v317, 0.0
      %321 = vadd.xlane.f32.xlu0 %v320
      %v322 = vpop.xlane.xlu0 %321
      %v323 = vsel %vm307, %v319, 0.0
      %324 = vadd.xlane.f32.xlu0 %v323
      %v325 = vpop.xlane.xlu0 %324
      %v326 = vlog2.pop %v322
      %v327 = vmul.f32 %v326, 0.6931472
      %v328 = vlog2.pop %v325
      %v329 = vmul.f32 %v328, 0.6931472
      %v330 = vlaneseq
      %v331 = vand.u32 %v330, 127
      %332 = vset.pattern.permute.xlu0 0
      %333 = vperm.xlu0 %332, %v305
      %v334 = vpop.permute.xlu0 %333
      %335 = vset.pattern.permute.xlu0 0
      %336 = vperm.xlu0 %335, %v306
      %v337 = vpop.permute.xlu0 %336
      %vm338 = vcmp.eq.s32.totalorder %v331, %v334
      %vm339 = vcmp.eq.s32.totalorder %v331, %v337
      %v340 = vsel %vm338, %v314, 0.0
      %v341 = vsel %vm339, %v315, 0.0
      %v342 = vsel %vm307, %v340, 0.0
      %343 = vadd.xlane.f32.xlu0 %v342
      %v344 = vpop.xlane.xlu0 %343
      %v345 = vsel %vm307, %v341, 0.0
      %346 = vadd.xlane.f32.xlu0 %v345
      %v347 = vpop.xlane.xlu0 %346
      %v348 = vsub.f32 %v327, %v344
      %v349 = vsub.f32 %v329, %v347
      %s350 = smul.u32 %s21, 2
      %s351 = sadd.s32 %s350, %s22
      %s352 = smul.u32 %s351, 16
      %v353 = vlaneseq
      %v354 = vshrl.u32 %v353, 7
      %v355 = vadd.s32 %v354, 8
      %v356 = vstv %s352
      %v357 = vadd.s32 %v356, %v354
      %v358 = vadd.s32 %v356, %v355
      %vm359 = vcmp.lt.s32.totalorder %v357, 64
      %vm360 = vcmp.lt.s32.totalorder %v358, 64
      %s361 = sld [smem:[#allocation2]]
      %v362 = vstv %s361
      %vm363 = vcmp.ge.f32.partialorder %v348, %v362
      %vm364 = vcmp.ge.f32.partialorder %v349, %v362
      %vm365 = vmand %vm359, %vm363
      %vm366 = vmand %vm360, %vm364
      %v367 = vld [vmem:[%s292] sm:$0x1]
      %v368 = vsel %vm365, %v348, 0.0
      %v369 = vsel %vm366, %v349, 0.0
      %vm370 = vcmask 7168
      %v371 = vsel %vm370, %v368, 0.0
      %v372 = vsel %vm370, %v369, 0.0
      %v373 = vadd.f32 %v371, %v372
      %374 = vadd.xlane.f32.xlu0 %v373
      %v375 = vpop.xlane.xlu0 %374
      %v376 = vrot.slane %v375, 4
      %v377 = vadd.f32 %v375, %v376
      %v378 = vrot.slane %v377, 2
      %v379 = vadd.f32 %v377, %v378
      %v380 = vrot.slane %v379, 1
      %v381 = vadd.f32 %v379, %v380
      %s382 = vtos %v381
      %v383 = vstv %s382
      %v384 = vadd.f32 %v367, %v383
      %vm385 = vcmask 0
      %386 = vst.msk [vmem:[%s292] sm:$0x1] %vm385, %v384
      %v387 = vld [vmem:[%s295] sm:$0x1]
      %v388 = vsel %vm365, 1.0, 0.0
      %v389 = vsel %vm366, 1.0, 0.0
      %v390 = vsel %vm370, %v388, 0.0
      %v391 = vsel %vm370, %v389, 0.0
      %v392 = vadd.f32 %v390, %v391
      %393 = vadd.xlane.f32.xlu0 %v392
      %v394 = vpop.xlane.xlu0 %393
      %v395 = vrot.slane %v394, 4
      %v396 = vadd.f32 %v394, %v395
      %v397 = vrot.slane %v396, 2
      %v398 = vadd.f32 %v396, %v397
      %v399 = vrot.slane %v398, 1
      %v400 = vadd.f32 %v398, %v399
      %s401 = vtos %v400
      %v402 = vstv %s401
      %v403 = vadd.f32 %v387, %v402
      %404 = vst.msk [vmem:[%s295] sm:$0x1] %vm385, %v403
      %p405 = scmp.lt.s32.totalorder %s21, 1
      %s406 = scalar_select %p405, %s21, 1
      %s407 = scalar_lea.vmem %s3, %s406
      %p408 = scmp.lt.s32.totalorder %s21, 1
      %s409 = scalar_select %p408, %s21, 1
      %s410 = scalar_lea.vmem %s4, %s409
      // Predicated region
      $region37: #{tsa_ce_loss.1} parent=31 // pred_check
        %p411 = pneg %p136
      $region38: #{tsa_ce_loss.1} parent=31 // pred_check_branch
        %413 = sbr.rel (%p411) target = $region40
      $region39: #{tsa_ce_loss.1} parent=31 // pred_region
        _
      $region40: #{tsa_ce_loss.1} parent=31 // pred_fallthru
        _
      // Predicated region
      $region41: #{tsa_ce_loss.1} parent=31 // pred_check
        %p414 = pneg %p162
      $region42: #{tsa_ce_loss.1} parent=31 // pred_check_branch
        %416 = sbr.rel (%p414) target = $region44
      $region43: #{tsa_ce_loss.1} parent=31 // pred_region
        _
      $region44: #{tsa_ce_loss.1} parent=31 // pred_fallthru
        _
    $region32: #{tsa_ce_loss.1} parent=5 // pred_fallthru
      _
    %p417 = scmp.le.s32.totalorder 2, %s12
    // Predicated region
    $region45: #{tsa_ce_loss.1} parent=5 // pred_check
      %p418 = pneg %p417
    $region46: #{tsa_ce_loss.1} parent=5 // pred_check_branch
      %420 = sbr.rel (%p418) target = $region48
    $region47: #{tsa_ce_loss.1} parent=5 // pred_region
      %s421 = ssub.s32 %s12, 2
      // Predicated region
      $region49: #{tsa_ce_loss.1} parent=47 // pred_check
        %p422 = pneg %p142
      $region50: #{tsa_ce_loss.1} parent=47 // pred_check_branch
        %424 = sbr.rel (%p422) target = $region52
      $region51: #{tsa_ce_loss.1} parent=47 // pred_region
        %p425 = scmp.lt.s32.totalorder %s23, 1
        %s426 = scalar_select %p425, %s23, 1
        %s427 = scalar_lea.vmem %s3, %s426
      $region52: #{tsa_ce_loss.1} parent=47 // pred_fallthru
        _
      // Predicated region
      $region53: #{tsa_ce_loss.1} parent=47 // pred_check
        %p428 = pneg %p168
      $region54: #{tsa_ce_loss.1} parent=47 // pred_check_branch
        %430 = sbr.rel (%p428) target = $region56
      $region55: #{tsa_ce_loss.1} parent=47 // pred_region
        %p431 = scmp.lt.s32.totalorder %s23, 1
        %s432 = scalar_select %p431, %s23, 1
        %s433 = scalar_lea.vmem %s4, %s432
      $region56: #{tsa_ce_loss.1} parent=47 // pred_fallthru
        _
    $region48: #{tsa_ce_loss.1} parent=5 // pred_fallthru
      _
  $region6: #{tsa_ce_loss.1} parent=0 // loop_footer
    %s16 = sadd.s32 1, %s12
  $region7: #{tsa_ce_loss.1} parent=0 // loop_footer_branch
    %11 = sbr.rel target = $region3
  $region8: #{tsa_ce_loss.1} parent=0 // loop_exit
    _

</llo_original>
